<compile_context>
chip_gen: v7x
topology: tpu7x:2x2x1
jax: 0.10.0
libtpu: 0.0.40
codegen_flags: <defaults>
</compile_context>

<pallas_src>
import functools

import jax
import jax.numpy as jnp
from jax.experimental import pallas as pl
from jax.experimental.pallas import tpu as pltpu


def _ls_kernel(pred_ref, tgt_ref, out_ref, m_sc, l_sc, w_sc, *,
               n_valid, classes, tile_rows, tile_cols, confidence, smooth_val,
               mask_cols):
    """One (batch-tile, class-tile) grid step of the smoothed cross entropy.

    pred_ref: (TN, TC) native-dtype VMEM tile of logits
    tgt_ref : (TN, 1)  int32 VMEM tile of class indices (resident across class axis)
    out_ref : (1, 128) f32 lane-dense per-row-tile partial sum (value replicated)
    m_sc/l_sc/w_sc: (TN, 1) f32 online-logsumexp / weighted-sum accumulators
    """
    i = pl.program_id(0)          # batch tile (parallel)
    k = pl.program_id(1)          # class tile (reduction axis, innermost)

    @pl.when(k == 0)
    def _():
        m_sc[...] = jnp.full(m_sc.shape, -jnp.inf, dtype=jnp.float32)
        l_sc[...] = jnp.zeros(l_sc.shape, dtype=jnp.float32)
        w_sc[...] = jnp.zeros(w_sc.shape, dtype=jnp.float32)

    x = pred_ref[...].astype(jnp.float32)                         # (TN, TC)
    tgt = tgt_ref[...]                                            # (TN, 1) i32

    col = (k * tile_cols
           + jax.lax.broadcasted_iota(jnp.int32, x.shape, 1))     # (TN, TC)
    # w_j = confidence at the target column, smoothing/(C-1) elsewhere.
    w = jnp.where(col == tgt, confidence, smooth_val)             # (TN, TC)

    if mask_cols:
        # Tail class tile: discard out-of-range columns with SELECTS so that
        # garbage / NaN in the padded region never reaches the accumulators.
        col_ok = col < classes
        x_for_max = jnp.where(col_ok, x, -jnp.inf)
        m_new = jnp.maximum(m_sc[...],
                            jnp.max(x_for_max, axis=-1, keepdims=True))
        p = jnp.where(col_ok, jnp.exp(x - m_new), 0.0)
        wx = jnp.where(col_ok, w * x, 0.0)
    else:
        m_new = jnp.maximum(m_sc[...], jnp.max(x, axis=-1, keepdims=True))
        p = jnp.exp(x - m_new)
        wx = w * x

    # Online (flash-style) logsumexp pieces + plain weighted sum (m-independent).
    alpha = jnp.exp(m_sc[...] - m_new)                            # (TN, 1)
    l_sc[...] = alpha * l_sc[...] + jnp.sum(p, axis=-1, keepdims=True)
    w_sc[...] = w_sc[...] + jnp.sum(wx, axis=-1, keepdims=True)
    m_sc[...] = m_new

    @pl.when(k == pl.num_programs(1) - 1)
    def _():
        # sum_j true_dist_j == 1  =>  per_row = logsumexp(x) - sum_j w_j x_j
        lse = m_sc[...] + jnp.log(l_sc[...])                      # (TN, 1)
        per_row = lse - w_sc[...]
        # Mask batch-padding rows of the tail tile (SELECT, not multiply, so
        # NaN/garbage rows are discarded instead of propagated).
        row = (i * tile_rows
               + jax.lax.broadcasted_iota(jnp.int32, per_row.shape, 0))
        per_row = jnp.where(row < n_valid, per_row, 0.0)
        out_ref[...] = jnp.broadcast_to(
            jnp.sum(per_row, axis=0, keepdims=True), out_ref.shape)


def _vmem_capacity_bytes():
    """Per-TensorCore VMEM capacity; conservative (v7x) default if unknown."""
    try:
        return int(pltpu.get_tpu_info().vmem_capacity_bytes)
    except Exception:
        return 64 << 20


def _tile_params(n, c, itemsize, vmem_capacity, block_rows=None, block_cols=None):
    """Pick (row_tile, class_tile, granularity) from a byte budget that counts
    the double-buffered native-dtype input AND the in-kernel f32 temporaries."""
    # dtype-native packed sublane granularity: f32 -> 8, bf16 -> 16, int8/fp8 -> 32
    gran = {4: 8, 2: 16, 1: 32}.get(itemsize, 8)

    if vmem_capacity <= (64 << 20):       # v7x-class: 64 MiB VMEM per TC
        tile_budget = 24 << 20
    else:                                 # v5e / v6e: 128 MiB VMEM per TC
        tile_budget = 48 << 20

    # Class (lane) tile: whole row when it fits, else lane-dense multiples of 128.
    if block_cols is not None:
        tc = c if int(block_cols) >= c else max(128, (int(block_cols) // 128) * 128)
    else:
        tc = c if c <= 2048 else 2048

    # VMEM working-set bytes per batch row:
    #   2 * tc * itemsize   double-buffered native-dtype input tile
    #   ~4 * tc * 4         live f32 temporaries (upcast x, exp, select, weighted)
    per_row = 2 * tc * itemsize + 4 * tc * 4 + 64

    if block_rows is not None:
        tn = max(gran, (int(block_rows) // gran) * gran)
    else:
        tn = int(tile_budget // per_row)
        tn = max(gran, min(4096, tn))
        tn = (tn // gran) * gran

    # Never let the row block exceed the batch; partial TAIL tiles (masked
    # in-kernel) are fine, oversize blocks are not needed.
    if tn >= n:
        tn = (n // gran) * gran if n >= gran else n
        tn = max(1, tn)
    return tn, tc, gran


def _vmem_limit_bytes(tn, tc, itemsize, vmem_capacity):
    pred_bufs = 2 * tn * tc * itemsize        # double-buffered input tiles
    tgt_bufs = 2 * tn * 512                   # (tn,1) i32 lane-padded, 2 buffers
    f32_temps = 4 * tn * tc * 4               # upcast / exp / select / weighted
    scratch = 3 * tn * 512                    # (tn,1) f32 accumulators, lane-padded
    out_bufs = 2 * 128 * 4
    needed = pred_bufs + tgt_bufs + f32_temps + scratch + out_bufs + (4 << 20)
    # Leave headroom below physical VMEM for compiler-internal scratch.
    cap = (48 << 20) if vmem_capacity <= (64 << 20) else (100 << 20)
    return int(min(cap, max(32 << 20, needed)))


def label_smoothing_loss(pred, target, *, classes, smoothing=0.0,
                         block_rows=None, block_cols=None):
    """pred: (N, C) float array (any float dtype), target: (N,) int array.

    Returns the scalar mean label-smoothed cross entropy (float32).
    """
    n, c = pred.shape
    assert c == classes
    assert classes > 1 or smoothing == 0.0, "smoothing/(classes-1) undefined"

    confidence = 1.0 - float(smoothing)
    smooth_val = float(smoothing) / (classes - 1) if classes > 1 else 0.0

    itemsize = jnp.dtype(pred.dtype).itemsize
    vmem_capacity = _vmem_capacity_bytes()
    tn, tc, _ = _tile_params(n, c, itemsize, vmem_capacity, block_rows, block_cols)

    num_row_tiles = pl.cdiv(n, tn)
    num_col_tiles = pl.cdiv(c, tc)
    mask_cols = (num_col_tiles * tc) != c or num_col_tiles > 1

    tgt2d = target.astype(jnp.int32).reshape(n, 1)

    kernel = functools.partial(
        _ls_kernel, n_valid=n, classes=classes, tile_rows=tn, tile_cols=tc,
        confidence=confidence, smooth_val=smooth_val, mask_cols=mask_cols)

    partials = pl.pallas_call(
        kernel,
        out_shape=jax.ShapeDtypeStruct((num_row_tiles, 128), jnp.float32),
        grid_spec=pltpu.PrefetchScalarGridSpec(
            num_scalar_prefetch=0,
            grid=(num_row_tiles, num_col_tiles),
            in_specs=[
                # native-dtype logits tile, streamed batch x class
                pl.BlockSpec((tn, tc), lambda i, k: (i, k)),
                # target ids: same block for every class tile (stays resident)
                pl.BlockSpec((tn, 1), lambda i, k: (i, 0)),
            ],
            out_specs=pl.BlockSpec((1, 128), lambda i, k: (i, 0)),
            scratch_shapes=[pltpu.VMEM((tn, 1), jnp.float32)] * 3,
        ),
        compiler_params=pltpu.CompilerParams(
            dimension_semantics=("parallel", "arbitrary"),
            vmem_limit_bytes=_vmem_limit_bytes(tn, tc, itemsize, vmem_capacity),
        ),
    )(pred, tgt2d)

    # Finalize: sum of per-row-tile partials, mean over the ORIGINAL batch size.
    return jnp.sum(partials[:, 0]) / n


def _reference(pred, target, *, classes, smoothing):
    """Pure-JAX reference mirroring the PyTorch module."""
    logp = jax.nn.log_softmax(pred.astype(jnp.float32), axis=-1)
    confidence = 1.0 - smoothing
    smooth_val = smoothing / (classes - 1)
    onehot = jax.nn.one_hot(target, classes, dtype=jnp.float32)
    true_dist = onehot * confidence + (1.0 - onehot) * smooth_val
    return jnp.mean(jnp.sum(-true_dist * logp, axis=-1))


if __name__ == "__main__":
    key = jax.random.PRNGKey(0)

    # Test 1: small f32 problem (batch=8, classes=128), single tile.
    N, C, smoothing = 8, 128, 0.1
    k1, k2, key = jax.random.split(key, 3)
    pred = jax.random.normal(k1, (N, C), dtype=jnp.float32)
    target = jax.random.randint(k2, (N,), 0, C, dtype=jnp.int32)
    loss = jax.block_until_ready(
        label_smoothing_loss(pred, target, classes=C, smoothing=smoothing))
    ref = _reference(pred, target, classes=C, smoothing=smoothing)
    assert jnp.allclose(loss, ref, atol=1e-5, rtol=1e-5), (loss, ref)

    # Test 2: bf16 input, batch not a multiple of the bf16 16-row granularity
    # (exercises unpadded tail-row masking + packed-dtype row tiling).
    N, C, smoothing = 20, 256, 0.2
    k1, k2, key = jax.random.split(key, 3)
    pred = jax.random.normal(k1, (N, C), dtype=jnp.float32).astype(jnp.bfloat16)
    target = jax.random.randint(k2, (N,), 0, C, dtype=jnp.int32)
    loss = jax.block_until_ready(
        label_smoothing_loss(pred, target, classes=C, smoothing=smoothing))
    ref = _reference(pred, target, classes=C, smoothing=smoothing)
    assert jnp.allclose(loss, ref, atol=1e-4, rtol=1e-4), (loss, ref)

    # Test 3: forced small row tiles -> multi-tile batch grid, exercises
    # pipelining and the lane-dense per-tile partial output path.
    N, C, smoothing = 64, 128, 0.1
    k1, k2, key = jax.random.split(key, 3)
    pred = jax.random.normal(k1, (N, C), dtype=jnp.float32)
    target = jax.random.randint(k2, (N,), 0, C, dtype=jnp.int32)
    loss = jax.block_until_ready(
        label_smoothing_loss(pred, target, classes=C, smoothing=smoothing,
                             block_rows=16))
    ref = _reference(pred, target, classes=C, smoothing=smoothing)
    assert jnp.allclose(loss, ref, atol=1e-5, rtol=1e-5), (loss, ref)

    # Test 4: forced small class tiles with C not a multiple of 128 ->
    # exercises the class-axis grid, online logsumexp and column masking.
    N, C, smoothing = 24, 300, 0.1
    k1, k2, key = jax.random.split(key, 3)
    pred = jax.random.normal(k1, (N, C), dtype=jnp.float32)
    target = jax.random.randint(k2, (N,), 0, C, dtype=jnp.int32)
    loss = jax.block_until_ready(
        label_smoothing_loss(pred, target, classes=C, smoothing=smoothing,
                             block_cols=128))
    ref = _reference(pred, target, classes=C, smoothing=smoothing)
    assert jnp.allclose(loss, ref, atol=1e-5, rtol=1e-5), (loss, ref)

    print("KERNEL_OK")
</pallas_src>

<mosaic_0001>
module attributes {stable_mosaic.version = 11 : i64} {
  func.func @_ls_kernel(%arg0: i32, %arg1: i32, %arg2: memref<8x128xf32, #tpu.memory_space<vmem>>, %arg3: memref<8x1xi32, #tpu.memory_space<vmem>>, %arg4: memref<1x128xf32, #tpu.memory_space<vmem>>, %arg5: memref<8x1xf32, #tpu.memory_space<vmem>>, %arg6: memref<8x1xf32, #tpu.memory_space<vmem>>, %arg7: memref<8x1xf32, #tpu.memory_space<vmem>>) attributes {dimension_semantics = [#tpu.dimension_semantics<parallel>, #tpu.dimension_semantics<arbitrary>], iteration_bounds = array<i64: 1, 1>, scalar_prefetch = 0 : i64, scratch_operands = 3 : i64, tpu.core_type = #tpu.core_type<tc>, window_params = [{transform_indices = @transform_0, window_bounds = array<i64: 8, 128>}, {transform_indices = @transform_1, window_bounds = array<i64: 8, 1>}, {transform_indices = @transform_2, window_bounds = array<i64: 1, 128>}]} {
    %c0_i32 = arith.constant 0 : i32
    %0 = arith.cmpi eq, %arg1, %c0_i32 : i32
    %1 = arith.extui %0 : i1 to i32
    %c0_i32_0 = arith.constant 0 : i32
    %2 = arith.cmpi ne, %1, %c0_i32_0 : i32
    scf.if %2 {
      %cst_24 = arith.constant 0xFF800000 : f32
      %40 = vector.broadcast %cst_24 : f32 to vector<8x1xf32>
      %c0_25 = arith.constant 0 : index
      %c0_26 = arith.constant 0 : index
      %41 = vector.load %arg5[%c0_25, %c0_26] : memref<8x1xf32, #tpu.memory_space<vmem>>, vector<8x1xf32>
      tpu.vector_store %arg5[%c0_25, %c0_26], %40 {strides = array<i32>} : memref<8x1xf32, #tpu.memory_space<vmem>>, vector<8x1xf32>,
      %cst_27 = arith.constant 0.000000e+00 : f32
      %42 = vector.broadcast %cst_27 : f32 to vector<8x1xf32>
      %c0_28 = arith.constant 0 : index
      %c0_29 = arith.constant 0 : index
      %43 = vector.load %arg6[%c0_28, %c0_29] : memref<8x1xf32, #tpu.memory_space<vmem>>, vector<8x1xf32>
      tpu.vector_store %arg6[%c0_28, %c0_29], %42 {strides = array<i32>} : memref<8x1xf32, #tpu.memory_space<vmem>>, vector<8x1xf32>,
      %cst_30 = arith.constant 0.000000e+00 : f32
      %44 = vector.broadcast %cst_30 : f32 to vector<8x1xf32>
      %c0_31 = arith.constant 0 : index
      %c0_32 = arith.constant 0 : index
      %45 = vector.load %arg7[%c0_31, %c0_32] : memref<8x1xf32, #tpu.memory_space<vmem>>, vector<8x1xf32>
      tpu.vector_store %arg7[%c0_31, %c0_32], %44 {strides = array<i32>} : memref<8x1xf32, #tpu.memory_space<vmem>>, vector<8x1xf32>,
    } else {
    }
    %c0 = arith.constant 0 : index
    %c0_1 = arith.constant 0 : index
    %3 = vector.load %arg2[%c0, %c0_1] : memref<8x128xf32, #tpu.memory_space<vmem>>, vector<8x128xf32>
    %c0_2 = arith.constant 0 : index
    %c0_3 = arith.constant 0 : index
    %4 = vector.load %arg3[%c0_2, %c0_3] : memref<8x1xi32, #tpu.memory_space<vmem>>, vector<8x1xi32>
    %c128_i32 = arith.constant 128 : i32
    %5 = arith.muli %arg1, %c128_i32 : i32
    %6 = tpu.iota {dimensions = array<i32: 1>} : vector<8x128xi32>
    %7 = vector.broadcast %5 : i32 to vector<8x128xi32>
    %8 = arith.addi %7, %6 : vector<8x128xi32>
    %9 = vector.broadcast %4 : vector<8x1xi32> to vector<8x128xi32>
    %10 = arith.cmpi eq, %8, %9 : vector<8x128xi32>
    %cst = arith.constant 0.899999976 : f32
    %cst_4 = arith.constant 7.87401571E-4 : f32
    %11 = vector.broadcast %cst : f32 to vector<8x128xf32>
    %12 = vector.broadcast %cst_4 : f32 to vector<8x128xf32>
    %13 = arith.select %10, %11, %12 : vector<8x128xi1>, vector<8x128xf32>
    %c0_5 = arith.constant 0 : index
    %c0_6 = arith.constant 0 : index
    %14 = vector.load %arg5[%c0_5, %c0_6] : memref<8x1xf32, #tpu.memory_space<vmem>>, vector<8x1xf32>
    %cst_7 = arith.constant dense<0xFF800000> : vector<8xf32>
    %15 = vector.multi_reduction <maximumf>, %3, %cst_7 [1] : vector<8x128xf32> to vector<8xf32>
    %16 = vector.shape_cast %15 : vector<8xf32> to vector<8x1xf32>
    %17 = arith.maximumf %14, %16 : vector<8x1xf32>
    %18 = vector.broadcast %17 : vector<8x1xf32> to vector<8x128xf32>
    %19 = arith.subf %3, %18 : vector<8x128xf32>
    %20 = math.exp %19 : vector<8x128xf32>
    %21 = arith.mulf %13, %3 : vector<8x128xf32>
    %c0_8 = arith.constant 0 : index
    %c0_9 = arith.constant 0 : index
    %22 = vector.load %arg5[%c0_8, %c0_9] : memref<8x1xf32, #tpu.memory_space<vmem>>, vector<8x1xf32>
    %23 = arith.subf %22, %17 : vector<8x1xf32>
    %24 = math.exp %23 : vector<8x1xf32>
    %c0_10 = arith.constant 0 : index
    %c0_11 = arith.constant 0 : index
    %25 = vector.load %arg6[%c0_10, %c0_11] : memref<8x1xf32, #tpu.memory_space<vmem>>, vector<8x1xf32>
    %26 = arith.mulf %24, %25 : vector<8x1xf32>
    %cst_12 = arith.constant dense<0.000000e+00> : vector<8xf32>
    %27 = vector.multi_reduction <add>, %20, %cst_12 [1] : vector<8x128xf32> to vector<8xf32>
    %28 = vector.shape_cast %27 : vector<8xf32> to vector<8x1xf32>
    %29 = arith.addf %26, %28 : vector<8x1xf32>
    %c0_13 = arith.constant 0 : index
    %c0_14 = arith.constant 0 : index
    %30 = vector.load %arg6[%c0_13, %c0_14] : memref<8x1xf32, #tpu.memory_space<vmem>>, vector<8x1xf32>
    tpu.vector_store %arg6[%c0_13, %c0_14], %29 {strides = array<i32>} : memref<8x1xf32, #tpu.memory_space<vmem>>, vector<8x1xf32>,
    %c0_15 = arith.constant 0 : index
    %c0_16 = arith.constant 0 : index
    %31 = vector.load %arg7[%c0_15, %c0_16] : memref<8x1xf32, #tpu.memory_space<vmem>>, vector<8x1xf32>
    %cst_17 = arith.constant dense<0.000000e+00> : vector<8xf32>
    %32 = vector.multi_reduction <add>, %21, %cst_17 [1] : vector<8x128xf32> to vector<8xf32>
    %33 = vector.shape_cast %32 : vector<8xf32> to vector<8x1xf32>
    %34 = arith.addf %31, %33 : vector<8x1xf32>
    %c0_18 = arith.constant 0 : index
    %c0_19 = arith.constant 0 : index
    %35 = vector.load %arg7[%c0_18, %c0_19] : memref<8x1xf32, #tpu.memory_space<vmem>>, vector<8x1xf32>
    tpu.vector_store %arg7[%c0_18, %c0_19], %34 {strides = array<i32>} : memref<8x1xf32, #tpu.memory_space<vmem>>, vector<8x1xf32>,
    %c0_20 = arith.constant 0 : index
    %c0_21 = arith.constant 0 : index
    %36 = vector.load %arg5[%c0_20, %c0_21] : memref<8x1xf32, #tpu.memory_space<vmem>>, vector<8x1xf32>
    tpu.vector_store %arg5[%c0_20, %c0_21], %17 {strides = array<i32>} : memref<8x1xf32, #tpu.memory_space<vmem>>, vector<8x1xf32>,
    %c0_i32_22 = arith.constant 0 : i32
    %37 = arith.cmpi eq, %arg1, %c0_i32_22 : i32
    %38 = arith.extui %37 : i1 to i32
    %c0_i32_23 = arith.constant 0 : i32
    %39 = arith.cmpi ne, %38, %c0_i32_23 : i32
    scf.if %39 {
      %c0_24 = arith.constant 0 : index
      %c0_25 = arith.constant 0 : index
      %40 = vector.load %arg5[%c0_24, %c0_25] : memref<8x1xf32, #tpu.memory_space<vmem>>, vector<8x1xf32>
      %c0_26 = arith.constant 0 : index
      %c0_27 = arith.constant 0 : index
      %41 = vector.load %arg6[%c0_26, %c0_27] : memref<8x1xf32, #tpu.memory_space<vmem>>, vector<8x1xf32>
      %42 = math.log %41 : vector<8x1xf32>
      %43 = arith.addf %40, %42 : vector<8x1xf32>
      %c0_28 = arith.constant 0 : index
      %c0_29 = arith.constant 0 : index
      %44 = vector.load %arg7[%c0_28, %c0_29] : memref<8x1xf32, #tpu.memory_space<vmem>>, vector<8x1xf32>
      %45 = arith.subf %43, %44 : vector<8x1xf32>
      %c8_i32 = arith.constant 8 : i32
      %46 = arith.muli %arg0, %c8_i32 : i32
      %47 = tpu.iota {dimensions = array<i32: 0>} : vector<8x1xi32>
      %48 = vector.broadcast %46 : i32 to vector<8x1xi32>
      %49 = arith.addi %48, %47 : vector<8x1xi32>
      %c8_i32_30 = arith.constant 8 : i32
      %50 = vector.broadcast %c8_i32_30 : i32 to vector<8x1xi32>
      %51 = arith.cmpi slt, %49, %50 : vector<8x1xi32>
      %cst_31 = arith.constant 0.000000e+00 : f32
      %52 = vector.broadcast %cst_31 : f32 to vector<8x1xf32>
      %53 = arith.select %51, %45, %52 : vector<8x1xi1>, vector<8x1xf32>
      %cst_32 = arith.constant dense<0.000000e+00> : vector<1xf32>
      %54 = vector.multi_reduction <add>, %53, %cst_32 [0] : vector<8x1xf32> to vector<1xf32>
      %55 = vector.shape_cast %54 : vector<1xf32> to vector<1x1xf32>
      %56 = vector.shape_cast %55 : vector<1x1xf32> to vector<1x1xf32>
      %57 = vector.broadcast %56 : vector<1x1xf32> to vector<1x128xf32>
      %c0_33 = arith.constant 0 : index
      %c0_34 = arith.constant 0 : index
      %58 = vector.load %arg4[%c0_33, %c0_34] : memref<1x128xf32, #tpu.memory_space<vmem>>, vector<1x128xf32>
      tpu.vector_store %arg4[%c0_33, %c0_34], %57 {strides = array<i32>} : memref<1x128xf32, #tpu.memory_space<vmem>>, vector<1x128xf32>,
    } else {
    }
    return
  }
  func.func @transform_0(%arg0: i32, %arg1: i32) -> (i32, i32) {
    %c0_i32 = arith.constant 0 : i32
    return %arg0, %arg1 : i32, i32
  }
  func.func @transform_1(%arg0: i32, %arg1: i32) -> (i32, i32) {
    %c0_i32 = arith.constant 0 : i32
    %c0_i32_0 = arith.constant 0 : i32
    return %arg0, %c0_i32 : i32, i32
  }
  func.func @transform_2(%arg0: i32, %arg1: i32) -> (i32, i32) {
    %c0_i32 = arith.constant 0 : i32
    %c0_i32_0 = arith.constant 0 : i32
    return %arg0, %c0_i32 : i32, i32
  }
}

</mosaic_0001>

<llo_original>
// kernel: tpu_custom_call.1
$region0: #{tpu_custom_call.1}
  #allocation0 [shape = 'u32[]', space=smem, size = 0x4, offset = 0x4, fixed_abs, tag = 'smem constant byte address 0x4 - core index']
  #allocation1 [shape = 'u32[144,128]{1,0:T(1,128)}', space=vmem, size = 0x12000, scoped, tag = 'internal scratch']
  #allocation2 [shape = 'f32[8,1]{1,0:T(8,128)}', space=vmem, size = 0x1000, scoped, tag = 'scratch operand']
  #allocation3 [shape = 'f32[8,1]{1,0:T(8,128)}', space=vmem, size = 0x1000, scoped, tag = 'scratch operand']
  #allocation4 [shape = 'f32[8,1]{1,0:T(8,128)}', space=vmem, size = 0x1000, scoped, tag = 'scratch operand']
  %s0 = inlined_call_operand.vmem [shape: f32[8,128], index: 0, kind: input, shape index: {}]
  %s1 = inlined_call_operand.vmem [shape: s32[8,1], index: 1, kind: input, shape index: {}]
  %s2 = inlined_call_operand.hbm [shape: f32[1,128], index: 2, kind: output, shape index: {}]
  %s3 = sld [smem:[#allocation0]]
  $region26: #{tpu_custom_call.1} parent=0
    _
  %s5 = ssub.s32 1, %s3
  %s6 = scalar_select 0, %s5, %s3
  $region1: #{tpu_custom_call.1} parent=0
    #allocation5 [shape = 'u8[512]{0}', space=vmem, size = 0x400, scoped, tag = 'output window, operand 0, single buffered']
    #allocation6 [shape = 's32[1]{0}', space=sflag, size = 0x4, scoped, tag = 'scoped memory for tpu_custom_call.1']
    %7 = vsyncpa [#allocation6], 0
    // Predicated region
    $region2: #{tpu_custom_call.1} parent=1 // pred_check
      _
    $region3: #{tpu_custom_call.1} parent=1 // pred_check_branch
      %9 = sbr.rel (0) target = $region5
    $region4: #{tpu_custom_call.1} parent=1 // pred_region
      _
    $region5: #{tpu_custom_call.1} parent=1 // pred_fallthru
      _
    // Predicated region
    $region6: #{tpu_custom_call.1} parent=1 // pred_check
      _
    $region7: #{tpu_custom_call.1} parent=1 // pred_check_branch
      %11 = sbr.rel (0) target = $region9
    $region8: #{tpu_custom_call.1} parent=1 // pred_region
      _
    $region9: #{tpu_custom_call.1} parent=1 // pred_fallthru
      _
    %p12 = scmp.eq.s32.totalorder 0, 0
    // Predicated region
    $region10: #{tpu_custom_call.1} parent=1 // pred_check
      %p13 = pneg %p12
    $region11: #{tpu_custom_call.1} parent=1 // pred_check_branch
      %15 = sbr.rel (%p13) target = $region13
    $region12: #{tpu_custom_call.1} parent=1 // pred_region
      %vm16 = vcmask 7168
      %17 = vst.msk [vmem:[#allocation2] sm:$0xff] %vm16, -inf
      %18 = vst.msk [vmem:[#allocation3] sm:$0xff] %vm16, 0.0
      %19 = vst.msk [vmem:[#allocation4] sm:$0xff] %vm16, 0.0
    $region13: #{tpu_custom_call.1} parent=1 // pred_fallthru
      _
    %v20 = vld [vmem:[%s0] sm:$0xff]
    %v21 = vld [vmem:[%s1] sm:$0xff]
    %s22 = smul.u32 0, 128
    %v23 = vlaneseq
    %v24 = vand.u32 %v23, 127
    %v25 = vstv %s22
    %v26 = vadd.s32 %v25, %v24
    %27 = vset.pattern.permute.xlu0 0
    %28 = vperm.xlu0 %27, %v21
    %v29 = vpop.permute.xlu0 %28
    %vm30 = vcmp.eq.s32.totalorder %v26, %v29
    %v31 = vsel %vm30, 0.9, 0.0007874016
    %v32 = vld [vmem:[#allocation2] sm:$0xff]
    %33 = vmax.xlane.f32.xlu0 %v20
    %v34 = vpop.xlane.xlu0 %33
    %v35 = vmax.f32 %v32, %v34
    %37 = vset.pattern.permute.xlu0 0
    %38 = vperm.xlu0 %37, %v35
    %v39 = vpop.permute.xlu0 %38
    %v41 = vsub.f32 %v20, %v39
    %v42 = vmul.f32 %v41, 1.442695
    %v43 = vpow.pop %v42
    %v44 = vmul.f32 %v31, %v20
    %v45 = vsub.f32 %v32, %v35
    %v46 = vmul.f32 %v45, 1.442695
    %v47 = vpow.pop %v46
    %v48 = vld [vmem:[#allocation3] sm:$0xff]
    %v49 = vmul.f32 %v47, %v48
    %50 = vadd.xlane.f32.xlu0 %v43
    %v51 = vpop.xlane.xlu0 %50
    %v52 = vadd.f32 %v49, %v51
    %vm53 = vcmask 7168
    %54 = vst.msk [vmem:[#allocation3] sm:$0xff] %vm53, %v52
    %v55 = vld [vmem:[#allocation4] sm:$0xff]
    %56 = vadd.xlane.f32.xlu0 %v44
    %v57 = vpop.xlane.xlu0 %56
    %v58 = vadd.f32 %v55, %v57
    %59 = vst.msk [vmem:[#allocation4] sm:$0xff] %vm53, %v58
    %60 = vst.msk [vmem:[#allocation2] sm:$0xff] %vm53, %v35
    // Predicated region
    $region14: #{tpu_custom_call.1} parent=1 // pred_check
      %p61 = pneg %p12
    $region15: #{tpu_custom_call.1} parent=1 // pred_check_branch
      %63 = sbr.rel (%p61) target = $region17
    $region16: #{tpu_custom_call.1} parent=1 // pred_region
      %v64 = vld [vmem:[#allocation2] sm:$0xff]
      %v65 = vld [vmem:[#allocation3] sm:$0xff]
      %v66 = vlog2.pop %v65
      %v67 = vmul.f32 %v66, 0.6931472
      %v68 = vadd.f32 %v64, %v67
      %v69 = vld [vmem:[#allocation4] sm:$0xff]
      %v70 = vsub.f32 %v68, %v69
      %s71 = smul.u32 0, 8
      %v72 = vlaneseq
      %v73 = vshrl.u32 %v72, 7
      %v74 = vstv %s71
      %v75 = vadd.s32 %v74, %v73
      %vm76 = vcmp.lt.s32.totalorder %v75, 8
      %v77 = vsel %vm76, %v70, 0.0
      %v78 = vsel %vm53, %v77, 0.0
      %v79 = vrot.slane %v78, 4
      %v80 = vadd.f32 %v78, %v79
      %v81 = vrot.slane %v80, 2
      %v82 = vadd.f32 %v80, %v81
      %v83 = vrot.slane %v82, 1
      %v84 = vadd.f32 %v82, %v83
      %86 = vset.pattern.permute.xlu0 0
      %87 = vperm.xlu0 %86, %v84
      %v88 = vpop.permute.xlu0 %87
      %90 = vst [vmem:[#allocation5] sm:$0x1] %v88
    $region17: #{tpu_custom_call.1} parent=1 // pred_fallthru
      _
    // Predicated region
    $region18: #{tpu_custom_call.1} parent=1 // pred_check
      _
    $region19: #{tpu_custom_call.1} parent=1 // pred_check_branch
      %92 = sbr.rel (0) target = $region21
    $region20: #{tpu_custom_call.1} parent=1 // pred_region
      %s94 = ssub.s32 16, 16
      %95 = vsyncadd [#allocation6], %s94
      %s97 = sshll.u32 [#allocation5], 4
      %s98 = int_to_ptr.vmem [resolvable:$true] %s97
      %100 = dma.vmem_to_hbm [thread:$0]  %s98, 16, %s2, [#allocation6]
    $region21: #{tpu_custom_call.1} parent=1 // pred_fallthru
      _
    // Predicated region
    $region22: #{tpu_custom_call.1} parent=1 // pred_check
      _
    $region23: #{tpu_custom_call.1} parent=1 // pred_check_branch
      %102 = sbr.rel (0) target = $region25
    $region24: #{tpu_custom_call.1} parent=1 // pred_region
      %103 = dma.done [#allocation6], 16
    $region25: #{tpu_custom_call.1} parent=1 // pred_fallthru
      _
    %104 = vsyncpa [#allocation6], 1

</llo_original>
